<compile_context>
chip_gen: v6e
topology: v6e:2x2x1
jax: 0.10.0
libtpu: 0.0.40
codegen_flags: <defaults>
</compile_context>

<pallas_src>
import jax
import jax.numpy as jnp
from jax.experimental import pallas as pl
from jax.experimental.pallas import tpu as pltpu


def _mlp_kernel(x_ref, w1_ref, b1_ref, w2_ref, b2_ref, o_ref):
    # fc1: cast x to bf16 at the MXU input (avoids a separate XLA cast of x
    # in HBM); accumulate in f32.
    x = x_ref[...].astype(jnp.bfloat16)
    h = jnp.dot(x, w1_ref[...], preferred_element_type=jnp.float32)
    # Bias + ReLU epilogue in f32, fused with the bf16 cast feeding fc2 so the
    # hidden activation is materialized only once.
    h = jnp.maximum(h + b1_ref[...], 0.0).astype(jnp.bfloat16)
    # fc2: bf16 MXU matmul, f32 accumulation, f32 bias add.
    out = jnp.dot(h, w2_ref[...], preferred_element_type=jnp.float32)
    o_ref[...] = (out + b2_ref[...]).astype(o_ref.dtype)


def prepare_params(w1, b1, w2, b2):
    """One-time parameter preprocessing (hoisted out of the per-call path).

    w1: [in, hid], b1: [hid] or [1, hid], w2: [hid, out], b2: [out] or [1, out].
    Weights -> bf16 (MXU input dtype); biases -> f32 for the f32 epilogue.
    """
    return (
        jnp.asarray(w1, jnp.bfloat16),
        jnp.asarray(b1, jnp.float32).reshape(1, -1),
        jnp.asarray(w2, jnp.bfloat16),
        jnp.asarray(b2, jnp.float32).reshape(1, -1),
    )


def _round_up(n, m):
    return ((n + m - 1) // m) * m


def _batch_tile(B, block_b):
    """Pick the batch tile.

    Small batches: a single full-extent block (block == full dim is always
    layout-legal, no padding needed).  Large batches: a multiple-of-8 tile
    capped at block_b, shrunk so there are >= 4 grid steps -- keeps the x/out
    DMA pipeline busy and lets the "parallel" batch axis shard across v7x's
    two TensorCores.
    """
    if B <= block_b and B < 4 * 64:
        return B
    tb = min(max(8, (block_b // 8) * 8), _round_up(B, 8))
    tb = min(tb, max(64, _round_up(pl.cdiv(B, 4), 64)))
    return tb


def predict_forward(x, params, *, block_b=256, out_dtype=None):
    """x: [B, in]; params from prepare_params(); returns [B, out]."""
    w1, b1, w2, b2 = params
    B, in_size = x.shape
    hid = w1.shape[1]
    out_size = w2.shape[1]
    out_dtype = jnp.dtype(x.dtype if out_dtype is None else out_dtype)

    tb = _batch_tile(B, block_b)
    grid = (pl.cdiv(B, tb),)

    # Explicit scoped-VMEM budget (defaults are 16 MiB on v5e, 32 MiB on
    # v6e/v7x -- well below physical).  Budget = block residency (weights
    # counted double-buffered to stay safe for the fallback path) +
    # intermediates, 2x headroom, clamped to ~7/8 of physical VMEM.
    itemsize_x = jnp.dtype(x.dtype).itemsize
    needed = (
        tb * in_size * (2 * itemsize_x + 2)              # x tile (2 bufs) + bf16 copy
        + 2 * 2 * (in_size * hid + hid * out_size)       # bf16 weights
        + 2 * 4 * (hid + out_size)                       # f32 biases
        + tb * hid * (4 + 2)                             # h in f32 + bf16
        + tb * out_size * (4 + 2 * out_dtype.itemsize)   # f32 acc + out tile (2 bufs)
    )
    try:
        vmem_cap = getattr(pltpu.get_tpu_info(), "vmem_capacity_bytes",
                           64 * 1024 * 1024)
    except Exception:
        vmem_cap = 64 * 1024 * 1024  # conservative (v7x per-core VMEM)
    vmem_limit = int(min(max(2 * needed, 32 * 1024 * 1024), vmem_cap * 7 // 8))

    cost = pl.CostEstimate(
        flops=2 * B * (in_size * hid + hid * out_size) + 2 * B * hid,
        transcendentals=0,
        bytes_accessed=(B * in_size * itemsize_x
                        + 2 * (in_size * hid + hid * out_size)
                        + 4 * (hid + out_size)
                        + B * out_size * out_dtype.itemsize),
    )

    def build(weight_pipeline_mode):
        wkw = ({} if weight_pipeline_mode is None
               else dict(pipeline_mode=weight_pipeline_mode))
        return pl.pallas_call(
            _mlp_kernel,
            out_shape=jax.ShapeDtypeStruct((B, out_size), out_dtype),
            grid_spec=pltpu.PrefetchScalarGridSpec(
                num_scalar_prefetch=0,
                grid=grid,
                in_specs=[
                    # x: batch-tiled, streamed through the double-buffered pipeline.
                    pl.BlockSpec((tb, in_size), lambda i: (i, 0)),
                    # Weights / biases: constant block index -> VMEM-resident;
                    # single-buffered (double-buffering a constant block only
                    # wastes VMEM and a warm-up DMA).
                    pl.BlockSpec((in_size, hid), lambda i: (0, 0), **wkw),
                    pl.BlockSpec((1, hid), lambda i: (0, 0), **wkw),
                    pl.BlockSpec((hid, out_size), lambda i: (0, 0), **wkw),
                    pl.BlockSpec((1, out_size), lambda i: (0, 0), **wkw),
                ],
                out_specs=pl.BlockSpec((tb, out_size), lambda i: (i, 0)),
            ),
            compiler_params=pltpu.CompilerParams(
                dimension_semantics=("parallel",),
                vmem_limit_bytes=vmem_limit,
            ),
            cost_estimate=cost,
        )

    # TODO(synk): for very large hidden/output sizes (bf16 weights approaching
    # the VMEM cap, esp. v7x's 64 MiB) add a K/N-tiled grid axis with an f32
    # accumulator scratch instead of fully resident weight blocks.
    try:
        return build(pl.Buffered(1))(x, w1, b1, w2, b2)
    except Exception:
        # Portability fallback if pipeline_mode=Buffered(1) is rejected by the
        # toolchain: identical kernel with default double-buffered weights.
        return build(None)(x, w1, b1, w2, b2)


def init_params(key, input_size, hidden_size, output_size, dtype=jnp.float32):
    """Deterministic init mimicking nn.Linear's uniform(-1/sqrt(fan_in), 1/sqrt(fan_in))."""
    k1, k2, k3, k4 = jax.random.split(key, 4)
    bound1 = 1.0 / jnp.sqrt(input_size)
    bound2 = 1.0 / jnp.sqrt(hidden_size)
    w1 = jax.random.uniform(k1, (input_size, hidden_size), dtype, -bound1, bound1)
    b1 = jax.random.uniform(k2, (1, hidden_size), dtype, -bound1, bound1)
    w2 = jax.random.uniform(k3, (hidden_size, output_size), dtype, -bound2, bound2)
    b2 = jax.random.uniform(k4, (1, output_size), dtype, -bound2, bound2)
    return w1, b1, w2, b2


if __name__ == "__main__":
    # Small shapes; all block dims equal the full array dims so no padding is
    # exercised, and the batch fits a single full-extent tile.
    input_size, hidden_size, output_size = 64, 128, 10
    batch = 40

    key = jax.random.PRNGKey(0)
    kx, kp = jax.random.split(key)
    x = jax.random.normal(kx, (batch, input_size), jnp.float32)
    w1, b1, w2, b2 = init_params(kp, input_size, hidden_size, output_size)
    params = prepare_params(w1, b1, w2, b2)   # one-time preprocessing

    out = predict_forward(x, params)
    out = jax.block_until_ready(out)
    assert out.shape == (batch, output_size)
    assert out.dtype == x.dtype

    # Reference with matching mixed precision (bf16 MXU inputs, f32 accum).
    xb = x.astype(jnp.bfloat16)
    h_ref = jnp.maximum(
        jnp.dot(xb, w1.astype(jnp.bfloat16),
                preferred_element_type=jnp.float32) + b1, 0.0
    ).astype(jnp.bfloat16)
    ref = jnp.dot(h_ref, w2.astype(jnp.bfloat16),
                  preferred_element_type=jnp.float32) + b2
    assert jnp.allclose(out, ref, atol=2e-2, rtol=2e-2)

    # Sanity check against pure-f32 math (looser tolerance for bf16 inputs).
    ref_f32 = jnp.maximum(x @ w1 + b1, 0.0) @ w2 + b2
    assert jnp.allclose(out, ref_f32, atol=1e-1, rtol=1e-1)

    print("KERNEL_OK")
</pallas_src>

<mosaic_0001>
module attributes {stable_mosaic.version = 11 : i64} {
  func.func @_mlp_kernel(%arg0: i32, %arg1: memref<40x64xf32, #tpu.memory_space<vmem>>, %arg2: memref<64x128xbf16, #tpu.memory_space<vmem>>, %arg3: memref<1x128xf32, #tpu.memory_space<vmem>>, %arg4: memref<128x10xbf16, #tpu.memory_space<vmem>>, %arg5: memref<1x10xf32, #tpu.memory_space<vmem>>, %arg6: memref<40x10xf32, #tpu.memory_space<vmem>>) attributes {dimension_semantics = [#tpu.dimension_semantics<parallel>], iteration_bounds = array<i64: 1>, scalar_prefetch = 0 : i64, scratch_operands = 0 : i64, tpu.core_type = #tpu.core_type<tc>, window_params = [{transform_indices = @transform_0, window_bounds = array<i64: 40, 64>}, {pipeline_mode = #tpu.pipeline_mode<synchronous>, transform_indices = @transform_1, window_bounds = array<i64: 64, 128>}, {pipeline_mode = #tpu.pipeline_mode<synchronous>, transform_indices = @transform_2, window_bounds = array<i64: 1, 128>}, {pipeline_mode = #tpu.pipeline_mode<synchronous>, transform_indices = @transform_3, window_bounds = array<i64: 128, 10>}, {pipeline_mode = #tpu.pipeline_mode<synchronous>, transform_indices = @transform_4, window_bounds = array<i64: 1, 10>}, {transform_indices = @transform_5, window_bounds = array<i64: 40, 10>}]} {
    %c0 = arith.constant 0 : index
    %c0_0 = arith.constant 0 : index
    %0 = vector.load %arg1[%c0, %c0_0] : memref<40x64xf32, #tpu.memory_space<vmem>>, vector<40x64xf32>
    %1 = arith.truncf %0 : vector<40x64xf32> to vector<40x64xbf16>
    %c0_1 = arith.constant 0 : index
    %c0_2 = arith.constant 0 : index
    %2 = vector.load %arg2[%c0_1, %c0_2] : memref<64x128xbf16, #tpu.memory_space<vmem>>, vector<64x128xbf16>
    %cst = arith.constant dense<0.000000e+00> : vector<40x128xf32>
    %3 = tpu.matmul %1, %2, %cst {dimension_numbers = #tpu.dot_dimension_numbers<[1], [0], [0], [1], [0, 0, 1, 1], [], []>} : vector<40x64xbf16>, vector<64x128xbf16>, vector<40x128xf32> -> vector<40x128xf32>
    %c0_3 = arith.constant 0 : index
    %c0_4 = arith.constant 0 : index
    %4 = vector.load %arg3[%c0_3, %c0_4] : memref<1x128xf32, #tpu.memory_space<vmem>>, vector<1x128xf32>
    %5 = vector.broadcast %4 : vector<1x128xf32> to vector<40x128xf32>
    %6 = arith.addf %3, %5 : vector<40x128xf32>
    %cst_5 = arith.constant 0.000000e+00 : f32
    %7 = vector.broadcast %cst_5 : f32 to vector<40x128xf32>
    %8 = arith.maximumf %6, %7 : vector<40x128xf32>
    %9 = arith.truncf %8 : vector<40x128xf32> to vector<40x128xbf16>
    %c0_6 = arith.constant 0 : index
    %c0_7 = arith.constant 0 : index
    %10 = vector.load %arg4[%c0_6, %c0_7] : memref<128x10xbf16, #tpu.memory_space<vmem>>, vector<128x10xbf16>
    %cst_8 = arith.constant dense<0.000000e+00> : vector<40x10xf32>
    %11 = tpu.matmul %9, %10, %cst_8 {dimension_numbers = #tpu.dot_dimension_numbers<[1], [0], [0], [1], [0, 0, 1, 1], [], []>} : vector<40x128xbf16>, vector<128x10xbf16>, vector<40x10xf32> -> vector<40x10xf32>
    %c0_9 = arith.constant 0 : index
    %c0_10 = arith.constant 0 : index
    %12 = vector.load %arg5[%c0_9, %c0_10] : memref<1x10xf32, #tpu.memory_space<vmem>>, vector<1x10xf32>
    %13 = vector.broadcast %12 : vector<1x10xf32> to vector<40x10xf32>
    %14 = arith.addf %11, %13 : vector<40x10xf32>
    %c0_11 = arith.constant 0 : index
    %c0_12 = arith.constant 0 : index
    %15 = vector.load %arg6[%c0_11, %c0_12] : memref<40x10xf32, #tpu.memory_space<vmem>>, vector<40x10xf32>
    tpu.vector_store %arg6[%c0_11, %c0_12], %14 {strides = array<i32>} : memref<40x10xf32, #tpu.memory_space<vmem>>, vector<40x10xf32>,
    return
  }
  func.func @transform_0(%arg0: i32) -> (i32, i32) {
    %c0_i32 = arith.constant 0 : i32
    %c0_i32_0 = arith.constant 0 : i32
    return %arg0, %c0_i32 : i32, i32
  }
  func.func @transform_1(%arg0: i32) -> (i32, i32) {
    %c0_i32 = arith.constant 0 : i32
    %c0_i32_0 = arith.constant 0 : i32
    %c0_i32_1 = arith.constant 0 : i32
    return %c0_i32, %c0_i32_0 : i32, i32
  }
  func.func @transform_2(%arg0: i32) -> (i32, i32) {
    %c0_i32 = arith.constant 0 : i32
    %c0_i32_0 = arith.constant 0 : i32
    %c0_i32_1 = arith.constant 0 : i32
    return %c0_i32, %c0_i32_0 : i32, i32
  }
  func.func @transform_3(%arg0: i32) -> (i32, i32) {
    %c0_i32 = arith.constant 0 : i32
    %c0_i32_0 = arith.constant 0 : i32
    %c0_i32_1 = arith.constant 0 : i32
    return %c0_i32, %c0_i32_0 : i32, i32
  }
  func.func @transform_4(%arg0: i32) -> (i32, i32) {
    %c0_i32 = arith.constant 0 : i32
    %c0_i32_0 = arith.constant 0 : i32
    %c0_i32_1 = arith.constant 0 : i32
    return %c0_i32, %c0_i32_0 : i32, i32
  }
  func.func @transform_5(%arg0: i32) -> (i32, i32) {
    %c0_i32 = arith.constant 0 : i32
    %c0_i32_0 = arith.constant 0 : i32
    return %arg0, %c0_i32 : i32, i32
  }
}

module attributes {stable_mosaic.version = 11 : i64} {
  func.func @_mlp_kernel(%arg0: i32, %arg1: memref<40x64xf32, #tpu.memory_space<vmem>>, %arg2: memref<64x128xbf16, #tpu.memory_space<vmem>>, %arg3: memref<1x128xf32, #tpu.memory_space<vmem>>, %arg4: memref<128x10xbf16, #tpu.memory_space<vmem>>, %arg5: memref<1x10xf32, #tpu.memory_space<vmem>>, %arg6: memref<40x10xf32, #tpu.memory_space<vmem>>) attributes {dimension_semantics = [#tpu.dimension_semantics<parallel>], iteration_bounds = array<i64: 1>, scalar_prefetch = 0 : i64, scratch_operands = 0 : i64, tpu.core_type = #tpu.core_type<tc>, window_params = [{transform_indices = @transform_0, window_bounds = array<i64: 40, 64>}, {pipeline_mode = #tpu.pipeline_mode<synchronous>, transform_indices = @transform_1, window_bounds = array<i64: 64, 128>}, {pipeline_mode = #tpu.pipeline_mode<synchronous>, transform_indices = @transform_2, window_bounds = array<i64: 1, 128>}, {pipeline_mode = #tpu.pipeline_mode<synchronous>, transform_indices = @transform_3, window_bounds = array<i64: 128, 10>}, {pipeline_mode = #tpu.pipeline_mode<synchronous>, transform_indices = @transform_4, window_bounds = array<i64: 1, 10>}, {transform_indices = @transform_5, window_bounds = array<i64: 40, 10>}]} {
    %c0 = arith.constant 0 : index
    %c0_0 = arith.constant 0 : index
    %0 = vector.load %arg1[%c0, %c0_0] : memref<40x64xf32, #tpu.memory_space<vmem>>, vector<40x64xf32>
    %1 = arith.truncf %0 : vector<40x64xf32> to vector<40x64xbf16>
    %c0_1 = arith.constant 0 : index
    %c0_2 = arith.constant 0 : index
    %2 = vector.load %arg2[%c0_1, %c0_2] : memref<64x128xbf16, #tpu.memory_space<vmem>>, vector<64x128xbf16>
    %cst = arith.constant dense<0.000000e+00> : vector<40x128xf32>
    %3 = tpu.matmul %1, %2, %cst {dimension_numbers = #tpu.dot_dimension_numbers<[1], [0], [0], [1], [0, 0, 1, 1], [], []>} : vector<40x64xbf16>, vector<64x128xbf16>, vector<40x128xf32> -> vector<40x128xf32>
    %c0_3 = arith.constant 0 : index
    %c0_4 = arith.constant 0 : index
    %4 = vector.load %arg3[%c0_3, %c0_4] : memref<1x128xf32, #tpu.memory_space<vmem>>, vector<1x128xf32>
    %5 = vector.broadcast %4 : vector<1x128xf32> to vector<40x128xf32>
    %6 = arith.addf %3, %5 : vector<40x128xf32>
    %cst_5 = arith.constant 0.000000e+00 : f32
    %7 = vector.broadcast %cst_5 : f32 to vector<40x128xf32>
    %8 = arith.maximumf %6, %7 : vector<40x128xf32>
    %9 = arith.truncf %8 : vector<40x128xf32> to vector<40x128xbf16>
    %c0_6 = arith.constant 0 : index
    %c0_7 = arith.constant 0 : index
    %10 = vector.load %arg4[%c0_6, %c0_7] : memref<128x10xbf16, #tpu.memory_space<vmem>>, vector<128x10xbf16>
    %cst_8 = arith.constant dense<0.000000e+00> : vector<40x10xf32>
    %11 = tpu.matmul %9, %10, %cst_8 {dimension_numbers = #tpu.dot_dimension_numbers<[1], [0], [0], [1], [0, 0, 1, 1], [], []>} : vector<40x128xbf16>, vector<128x10xbf16>, vector<40x10xf32> -> vector<40x10xf32>
    %c0_9 = arith.constant 0 : index
    %c0_10 = arith.constant 0 : index
    %12 = vector.load %arg5[%c0_9, %c0_10] : memref<1x10xf32, #tpu.memory_space<vmem>>, vector<1x10xf32>
    %13 = vector.broadcast %12 : vector<1x10xf32> to vector<40x10xf32>
    %14 = arith.addf %11, %13 : vector<40x10xf32>
    %c0_11 = arith.constant 0 : index
    %c0_12 = arith.constant 0 : index
    %15 = vector.load %arg6[%c0_11, %c0_12] : memref<40x10xf32, #tpu.memory_space<vmem>>, vector<40x10xf32>
    tpu.vector_store %arg6[%c0_11, %c0_12], %14 {strides = array<i32>} : memref<40x10xf32, #tpu.memory_space<vmem>>, vector<40x10xf32>,
    return
  }
  func.func @transform_0(%arg0: i32) -> (i32, i32) {
    %c0_i32 = arith.constant 0 : i32
    %c0_i32_0 = arith.constant 0 : i32
    return %arg0, %c0_i32 : i32, i32
  }
  func.func @transform_1(%arg0: i32) -> (i32, i32) {
    %c0_i32 = arith.constant 0 : i32
    %c0_i32_0 = arith.constant 0 : i32
    %c0_i32_1 = arith.constant 0 : i32
    return %c0_i32, %c0_i32_0 : i32, i32
  }
  func.func @transform_2(%arg0: i32) -> (i32, i32) {
    %c0_i32 = arith.constant 0 : i32
    %c0_i32_0 = arith.constant 0 : i32
    %c0_i32_1 = arith.constant 0 : i32
    return %c0_i32, %c0_i32_0 : i32, i32
  }
  func.func @transform_3(%arg0: i32) -> (i32, i32) {
    %c0_i32 = arith.constant 0 : i32
    %c0_i32_0 = arith.constant 0 : i32
    %c0_i32_1 = arith.constant 0 : i32
    return %c0_i32, %c0_i32_0 : i32, i32
  }
  func.func @transform_4(%arg0: i32) -> (i32, i32) {
    %c0_i32 = arith.constant 0 : i32
    %c0_i32_0 = arith.constant 0 : i32
    %c0_i32_1 = arith.constant 0 : i32
    return %c0_i32, %c0_i32_0 : i32, i32
  }
  func.func @transform_5(%arg0: i32) -> (i32, i32) {
    %c0_i32 = arith.constant 0 : i32
    %c0_i32_0 = arith.constant 0 : i32
    return %arg0, %c0_i32 : i32, i32
  }
}

</mosaic_0001>

<llo_original>
// kernel: tpu_custom_call.1
$region0: #{tpu_custom_call.1}
  #allocation0 [shape = 'u32[]', space=smem, size = 0x4, offset = 0x4, fixed_abs, tag = 'smem constant byte address 0x4 - core index']
  #allocation1 [shape = 'u32[144,128]{1,0:T(1,128)}', space=vmem, size = 0x12000, scoped, tag = 'internal scratch']
  %s0 = inlined_call_operand.vmem [shape: f32[40,64], index: 0, kind: input, shape index: {}]
  %s1 = inlined_call_operand.vmem [shape: bf16[64,128], index: 1, kind: input, shape index: {}]
  %s2 = inlined_call_operand.vmem [shape: f32[1,128], index: 2, kind: input, shape index: {}]
  %s3 = inlined_call_operand.vmem [shape: bf16[128,10], index: 3, kind: input, shape index: {}]
  %s4 = inlined_call_operand.vmem [shape: f32[1,10], index: 4, kind: input, shape index: {}]
  %s5 = inlined_call_operand.vmem [shape: f32[40,10], index: 5, kind: output, shape index: {}]
  %s6 = sld [smem:[#allocation0]]
  $region30: #{tpu_custom_call.1} parent=0
    _
  %s8 = ssub.s32 1, %s6
  %s9 = scalar_select 0, %s8, %s6
  // Predicated region
  $region2: #{tpu_custom_call.1} parent=0 // pred_check
    _
  $region3: #{tpu_custom_call.1} parent=0 // pred_check_branch
    %11 = sbr.rel (0) target = $region5
  $region4: #{tpu_custom_call.1} parent=0 // pred_region
    _
  $region5: #{tpu_custom_call.1} parent=0 // pred_fallthru
    _
  // Predicated region
  $region6: #{tpu_custom_call.1} parent=0 // pred_check
    _
  $region7: #{tpu_custom_call.1} parent=0 // pred_check_branch
    %13 = sbr.rel (0) target = $region9
  $region8: #{tpu_custom_call.1} parent=0 // pred_region
    _
  $region9: #{tpu_custom_call.1} parent=0 // pred_fallthru
    _
  // Predicated region
  $region10: #{tpu_custom_call.1} parent=0 // pred_check
    _
  $region11: #{tpu_custom_call.1} parent=0 // pred_check_branch
    %15 = sbr.rel (0) target = $region13
  $region12: #{tpu_custom_call.1} parent=0 // pred_region
    _
  $region13: #{tpu_custom_call.1} parent=0 // pred_fallthru
    _
  // Predicated region
  $region14: #{tpu_custom_call.1} parent=0 // pred_check
    _
  $region15: #{tpu_custom_call.1} parent=0 // pred_check_branch
    %17 = sbr.rel (0) target = $region17
  $region16: #{tpu_custom_call.1} parent=0 // pred_region
    _
  $region17: #{tpu_custom_call.1} parent=0 // pred_fallthru
    _
  // Predicated region
  $region18: #{tpu_custom_call.1} parent=0 // pred_check
    _
  $region19: #{tpu_custom_call.1} parent=0 // pred_check_branch
    %19 = sbr.rel (0) target = $region21
  $region20: #{tpu_custom_call.1} parent=0 // pred_region
    _
  $region21: #{tpu_custom_call.1} parent=0 // pred_fallthru
    _
  %v21 = vld [vmem:[%s0] sm:$0xff]
  %v22 = vld [vmem:[%s0 + $0x8] sm:$0xff]
  %v23 = vld [vmem:[%s0 + $0x10] sm:$0xff]
  %v24 = vld [vmem:[%s0 + $0x18] sm:$0xff]
  %v25 = vld [vmem:[%s0 + $0x20] sm:$0xff]
  %v26 = vpack.c.bf16 %v22, %v21
  %v27 = vpack.c.bf16 %v24, %v23
  %v28 = vpack.c.bf16 %v25, %v25
  %v29 = vld [vmem:[%s1] sm:$0xf]
  %v30 = vld [vmem:[%s1 + $0x4] sm:$0xf]
  %v31 = vld [vmem:[%s1 + $0x8] sm:$0xf]
  %v32 = vld [vmem:[%s1 + $0xc] sm:$0xf]
  %v33 = vld [vmem:[%s1 + $0x10] sm:$0xf]
  %v34 = vld [vmem:[%s1 + $0x14] sm:$0xf]
  %v35 = vld [vmem:[%s1 + $0x18] sm:$0xf]
  %v36 = vld [vmem:[%s1 + $0x1c] sm:$0xf]
  %v37 = vld [vmem:[%s2] sm:$0x1]
  %v39 = vlaneseq
  %v40 = vshrl.u32 %v39, 7
  %v41 = vsub.s32 0, %v40
  %v42 = vrot.slane %v37, %v41
  %v52 = vunpack.c.l.b16 %v29
  %v53 = vunpack.c.l.b16 %v30
  %v54 = vunpack.c.l.b16 %v31
  %v55 = vunpack.c.l.b16 %v32
  %v56 = vunpack.c.l.b16 %v33
  %v57 = vunpack.c.l.b16 %v34
  %v58 = vunpack.c.l.b16 %v35
  %v59 = vunpack.c.l.b16 %v36
  %v60 = vpack.c.b16 %v53, %v52
  %v61 = vpack.c.b16 %v55, %v54
  %v62 = vpack.c.b16 %v57, %v56
  %v63 = vpack.c.b16 %v59, %v58
  %vm68 = vcmask 523264
  %v70 = vsel %vm68, %v26, 0
  %v73 = vsel %vm68, %v27, 0
  %v76 = vsel %vm68, %v28, 0
  %78 = vmatprep.subr.bf16.mxu0 0
  %79 = vmatpush1.bf16.msra.mxu0 0
  %80 = vmatprep.subr.bf16.mxu0 0
  %81 = vmatpush1.bf16.msra.mxu0 0
  %82 = vmatprep.subr.bf16.mxu0 0
  %83 = vmatpush1.bf16.msra.mxu0 0
  %84 = vmatprep.subr.bf16.mxu0 0
  %85 = vmatpush1.bf16.msra.mxu0 0
  %86 = vmatprep.subr.bf16.mxu0 0
  %87 = vmatpush1.bf16.msra.mxu0 %v63
  %88 = vmatprep.subr.bf16.mxu0 0
  %89 = vmatpush1.bf16.msra.mxu0 %v62
  %90 = vmatprep.subr.bf16.mxu0 0
  %91 = vmatpush1.bf16.msra.mxu0 %v61
  %92 = vmatprep.subr.bf16.mxu0 0
  %93 = vmatpush1.bf16.msra.mxu0 %v60
  %94 = vmatprep.subr.bf16.mxu0 0
  %95 = vmatpush2.bf16.msra.mxu0 0
  %96 = vmatprep.subr.bf16.mxu0 0
  %97 = vmatpush2.bf16.msra.mxu0 0
  %98 = vmatprep.subr.bf16.mxu0 0
  %99 = vmatpush2.bf16.msra.mxu0 0
  %100 = vmatprep.subr.bf16.mxu0 0
  %101 = vmatpush2.bf16.msra.mxu0 0
  %102 = vmatprep.subr.bf16.mxu0 0
  %103 = vmatpush2.bf16.msra.mxu0 0
  %104 = vmatprep.subr.bf16.mxu0 0
  %105 = vmatpush2.bf16.msra.mxu0 0
  %106 = vmatprep.subr.bf16.mxu0 0
  %107 = vmatpush2.bf16.msra.mxu0 0
  %108 = vmatprep.subr.bf16.mxu0 0
  %109 = vmatpush2.bf16.msra.mxu0 0
  %110 = vmatprep.mubr.bf16.mxu0 0
  %111 = vmatmul.mubr.bf16.gmra.mxu0 %v70
  %v112 = vpop.f32.mrf.mxu0
  %v113 = vadd.f32 %v42, %v112
  %v114 = vpop.f32.mrf.mxu0
  %v115 = vpop.f32.mrf.mxu0
  %v116 = vadd.f32 %v42, %v115
  %v117 = vpop.f32.mrf.mxu0
  %118 = vmatprep.mubr.bf16.mxu0 0
  %119 = vmatmul.mubr.bf16.gmra.mxu0 %v73
  %v120 = vpop.f32.mrf.mxu0
  %v121 = vadd.f32 %v42, %v120
  %v122 = vpop.f32.mrf.mxu0
  %v123 = vpop.f32.mrf.mxu0
  %v124 = vadd.f32 %v42, %v123
  %v125 = vpop.f32.mrf.mxu0
  %126 = vmatprep.mubr.bf16.mxu0 0
  %127 = vmatmul.mubr.bf16.gmra.mxu0 %v76
  %v128 = vpop.f32.mrf.mxu0
  %v129 = vadd.f32 %v42, %v128
  %v130 = vpop.f32.mrf.mxu0
  %v131 = vpop.f32.mrf.mxu0
  %v132 = vpop.f32.mrf.mxu0
  %133 = vdwg.mxu0
  %v134 = vmax.f32 %v113, 0.0
  %v135 = vmax.f32 %v116, 0.0
  %v136 = vmax.f32 %v121, 0.0
  %v137 = vmax.f32 %v124, 0.0
  %v138 = vmax.f32 %v129, 0.0
  %v139 = vpack.c.bf16 %v135, %v134
  %v140 = vpack.c.bf16 %v137, %v136
  %v141 = vpack.c.bf16 %v138, %v138
  %v142 = vld [vmem:[%s3] sm:$0xf]
  %v143 = vld [vmem:[%s3 + $0x4] sm:$0xf]
  %v144 = vld [vmem:[%s3 + $0x8] sm:$0xf]
  %v145 = vld [vmem:[%s3 + $0xc] sm:$0xf]
  %v146 = vld [vmem:[%s3 + $0x10] sm:$0xf]
  %v147 = vld [vmem:[%s3 + $0x14] sm:$0xf]
  %v148 = vld [vmem:[%s3 + $0x18] sm:$0xf]
  %v149 = vld [vmem:[%s3 + $0x1c] sm:$0xf]
  %v150 = vld [vmem:[%s3 + $0x20] sm:$0xf]
  %v151 = vld [vmem:[%s3 + $0x24] sm:$0xf]
  %v152 = vld [vmem:[%s3 + $0x28] sm:$0xf]
  %v153 = vld [vmem:[%s3 + $0x2c] sm:$0xf]
  %v154 = vld [vmem:[%s3 + $0x30] sm:$0xf]
  %v155 = vld [vmem:[%s3 + $0x34] sm:$0xf]
  %v156 = vld [vmem:[%s3 + $0x38] sm:$0xf]
  %v157 = vld [vmem:[%s3 + $0x3c] sm:$0xf]
  %v158 = vld [vmem:[%s4] sm:$0x1]
  %v160 = vlaneseq
  %v161 = vshrl.u32 %v160, 7
  %v162 = vsub.s32 0, %v161
  %v163 = vrot.slane %v158, %v162
  %v181 = vunpack.c.l.b16 %v142
  %v182 = vunpack.c.l.b16 %v143
  %v183 = vunpack.c.l.b16 %v144
  %v184 = vunpack.c.l.b16 %v145
  %v185 = vunpack.c.l.b16 %v146
  %v186 = vunpack.c.l.b16 %v147
  %v187 = vunpack.c.l.b16 %v148
  %v188 = vunpack.c.l.b16 %v149
  %v189 = vunpack.c.l.b16 %v150
  %v190 = vunpack.c.l.b16 %v151
  %v191 = vunpack.c.l.b16 %v152
  %v192 = vunpack.c.l.b16 %v153
  %v193 = vunpack.c.l.b16 %v154
  %v194 = vunpack.c.l.b16 %v155
  %v195 = vunpack.c.l.b16 %v156
  %v196 = vunpack.c.l.b16 %v157
  %v197 = vpack.c.b16 %v182, %v181
  %v198 = vpack.c.b16 %v184, %v183
  %v199 = vpack.c.b16 %v186, %v185
  %v200 = vpack.c.b16 %v188, %v187
  %v201 = vpack.c.b16 %v190, %v189
  %v202 = vpack.c.b16 %v192, %v191
  %v203 = vpack.c.b16 %v194, %v193
  %v204 = vpack.c.b16 %v196, %v195
  %213 = vmatprep.subr.bf16.mxu0 0
  %214 = vmatpush1.bf16.msra.mxu0 %v204
  %215 = vmatprep.subr.bf16.mxu0 0
  %216 = vmatpush1.bf16.msra.mxu0 %v203
  %217 = vmatprep.subr.bf16.mxu0 0
  %218 = vmatpush1.bf16.msra.mxu0 %v202
  %219 = vmatprep.subr.bf16.mxu0 0
  %220 = vmatpush1.bf16.msra.mxu0 %v201
  %221 = vmatprep.subr.bf16.mxu0 0
  %222 = vmatpush1.bf16.msra.mxu0 %v200
  %223 = vmatprep.subr.bf16.mxu0 0
  %224 = vmatpush1.bf16.msra.mxu0 %v199
  %225 = vmatprep.subr.bf16.mxu0 0
  %226 = vmatpush1.bf16.msra.mxu0 %v198
  %227 = vmatprep.subr.bf16.mxu0 0
  %228 = vmatpush1.bf16.msra.mxu0 %v197
  %229 = vmatprep.subr.bf16.mxu0 0
  %230 = vmatpush2.bf16.msra.mxu0 0
  %231 = vmatprep.subr.bf16.mxu0 0
  %232 = vmatpush2.bf16.msra.mxu0 0
  %233 = vmatprep.subr.bf16.mxu0 0
  %234 = vmatpush2.bf16.msra.mxu0 0
  %235 = vmatprep.subr.bf16.mxu0 0
  %236 = vmatpush2.bf16.msra.mxu0 0
  %237 = vmatprep.subr.bf16.mxu0 0
  %238 = vmatpush2.bf16.msra.mxu0 0
  %239 = vmatprep.subr.bf16.mxu0 0
  %240 = vmatpush2.bf16.msra.mxu0 0
  %241 = vmatprep.subr.bf16.mxu0 0
  %242 = vmatpush2.bf16.msra.mxu0 0
  %243 = vmatprep.subr.bf16.mxu0 0
  %244 = vmatpush2.bf16.msra.mxu0 0
  %245 = vmatprep.mubr.bf16.mxu0 0
  %246 = vmatmul.mubr.bf16.gmra.mxu0 %v139
  %v247 = vpop.f32.mrf.mxu0
  %v248 = vadd.f32 %v163, %v247
  %v249 = vpop.f32.mrf.mxu0
  %v250 = vpop.f32.mrf.mxu0
  %v251 = vadd.f32 %v163, %v250
  %v252 = vpop.f32.mrf.mxu0
  %253 = vmatprep.mubr.bf16.mxu0 0
  %254 = vmatmul.mubr.bf16.gmra.mxu0 %v140
  %v255 = vpop.f32.mrf.mxu0
  %v256 = vadd.f32 %v163, %v255
  %v257 = vpop.f32.mrf.mxu0
  %v258 = vpop.f32.mrf.mxu0
  %v259 = vadd.f32 %v163, %v258
  %v260 = vpop.f32.mrf.mxu0
  %261 = vmatprep.mubr.bf16.mxu0 0
  %262 = vmatmul.mubr.bf16.gmra.mxu0 %v141
  %v263 = vpop.f32.mrf.mxu0
  %v264 = vadd.f32 %v163, %v263
  %v265 = vpop.f32.mrf.mxu0
  %v266 = vpop.f32.mrf.mxu0
  %v267 = vpop.f32.mrf.mxu0
  %268 = vdwg.mxu0
  %vm269 = vcmask 80896
  %270 = vst.msk [vmem:[%s5] sm:$0xff] %vm269, %v248
  %271 = vst.msk [vmem:[%s5 + $0x8] sm:$0xff] %vm269, %v251
  %272 = vst.msk [vmem:[%s5 + $0x10] sm:$0xff] %vm269, %v256
  %273 = vst.msk [vmem:[%s5 + $0x18] sm:$0xff] %vm269, %v259
  %274 = vst.msk [vmem:[%s5 + $0x20] sm:$0xff] %vm269, %v264
  // Predicated region
  $region22: #{tpu_custom_call.1} parent=0 // pred_check
    _
  $region23: #{tpu_custom_call.1} parent=0 // pred_check_branch
    %276 = sbr.rel (0) target = $region25
  $region24: #{tpu_custom_call.1} parent=0 // pred_region
    _
  $region25: #{tpu_custom_call.1} parent=0 // pred_fallthru
    _
  // Predicated region
  $region26: #{tpu_custom_call.1} parent=0 // pred_check
    _
  $region27: #{tpu_custom_call.1} parent=0 // pred_check_branch
    %278 = sbr.rel (0) target = $region29
  $region28: #{tpu_custom_call.1} parent=0 // pred_region
    _
  $region29: #{tpu_custom_call.1} parent=0 // pred_fallthru
    _

// kernel: tpu_custom_call.1
$region0: #{tpu_custom_call.1}
  #allocation0 [shape = 'u32[]', space=smem, size = 0x4, offset = 0x4, fixed_abs, tag = 'smem constant byte address 0x4 - core index']
  #allocation1 [shape = 'u32[144,128]{1,0:T(1,128)}', space=vmem, size = 0x12000, scoped, tag = 'internal scratch']
  %s0 = inlined_call_operand.vmem [shape: f32[40,64], index: 0, kind: input, shape index: {}]
  %s1 = inlined_call_operand.vmem [shape: bf16[64,128], index: 1, kind: input, shape index: {}]
  %s2 = inlined_call_operand.vmem [shape: f32[1,128], index: 2, kind: input, shape index: {}]
  %s3 = inlined_call_operand.vmem [shape: bf16[128,10], index: 3, kind: input, shape index: {}]
  %s4 = inlined_call_operand.vmem [shape: f32[1,10], index: 4, kind: input, shape index: {}]
  %s5 = inlined_call_operand.vmem [shape: f32[40,10], index: 5, kind: output, shape index: {}]
  %s6 = sld [smem:[#allocation0]]
  $region30: #{tpu_custom_call.1} parent=0
    _
  %s8 = ssub.s32 1, %s6
  %s9 = scalar_select 0, %s8, %s6
  // Predicated region
  $region2: #{tpu_custom_call.1} parent=0 // pred_check
    _
  $region3: #{tpu_custom_call.1} parent=0 // pred_check_branch
    %11 = sbr.rel (0) target = $region5
  $region4: #{tpu_custom_call.1} parent=0 // pred_region
    _
  $region5: #{tpu_custom_call.1} parent=0 // pred_fallthru
    _
  // Predicated region
  $region6: #{tpu_custom_call.1} parent=0 // pred_check
    _
  $region7: #{tpu_custom_call.1} parent=0 // pred_check_branch
    %13 = sbr.rel (0) target = $region9
  $region8: #{tpu_custom_call.1} parent=0 // pred_region
    _
  $region9: #{tpu_custom_call.1} parent=0 // pred_fallthru
    _
  // Predicated region
  $region10: #{tpu_custom_call.1} parent=0 // pred_check
    _
  $region11: #{tpu_custom_call.1} parent=0 // pred_check_branch
    %15 = sbr.rel (0) target = $region13
  $region12: #{tpu_custom_call.1} parent=0 // pred_region
    _
  $region13: #{tpu_custom_call.1} parent=0 // pred_fallthru
    _
  // Predicated region
  $region14: #{tpu_custom_call.1} parent=0 // pred_check
    _
  $region15: #{tpu_custom_call.1} parent=0 // pred_check_branch
    %17 = sbr.rel (0) target = $region17
  $region16: #{tpu_custom_call.1} parent=0 // pred_region
    _
  $region17: #{tpu_custom_call.1} parent=0 // pred_fallthru
    _
  // Predicated region
  $region18: #{tpu_custom_call.1} parent=0 // pred_check
    _
  $region19: #{tpu_custom_call.1} parent=0 // pred_check_branch
    %19 = sbr.rel (0) target = $region21
  $region20: #{tpu_custom_call.1} parent=0 // pred_region
    _
  $region21: #{tpu_custom_call.1} parent=0 // pred_fallthru
    _
  %v21 = vld [vmem:[%s0] sm:$0xff]
  %v22 = vld [vmem:[%s0 + $0x8] sm:$0xff]
  %v23 = vld [vmem:[%s0 + $0x10] sm:$0xff]
  %v24 = vld [vmem:[%s0 + $0x18] sm:$0xff]
  %v25 = vld [vmem:[%s0 + $0x20] sm:$0xff]
  %v26 = vpack.c.bf16 %v22, %v21
  %v27 = vpack.c.bf16 %v24, %v23
  %v28 = vpack.c.bf16 %v25, %v25
  %v29 = vld [vmem:[%s1] sm:$0xf]
  %v30 = vld [vmem:[%s1 + $0x4] sm:$0xf]
  %v31 = vld [vmem:[%s1 + $0x8] sm:$0xf]
  %v32 = vld [vmem:[%s1 + $0xc] sm:$0xf]
  %v33 = vld [vmem:[%s1 + $0x10] sm:$0xf]
  %v34 = vld [vmem:[%s1 + $0x14] sm:$0xf]
  %v35 = vld [vmem:[%s1 + $0x18] sm:$0xf]
  %v36 = vld [vmem:[%s1 + $0x1c] sm:$0xf]
  %v37 = vld [vmem:[%s2] sm:$0x1]
  %v39 = vlaneseq
  %v40 = vshrl.u32 %v39, 7
  %v41 = vsub.s32 0, %v40
  %v42 = vrot.slane %v37, %v41
  %v52 = vunpack.c.l.b16 %v29
  %v53 = vunpack.c.l.b16 %v30
  %v54 = vunpack.c.l.b16 %v31
  %v55 = vunpack.c.l.b16 %v32
  %v56 = vunpack.c.l.b16 %v33
  %v57 = vunpack.c.l.b16 %v34
  %v58 = vunpack.c.l.b16 %v35
  %v59 = vunpack.c.l.b16 %v36
  %v60 = vpack.c.b16 %v53, %v52
  %v61 = vpack.c.b16 %v55, %v54
  %v62 = vpack.c.b16 %v57, %v56
  %v63 = vpack.c.b16 %v59, %v58
  %vm68 = vcmask 523264
  %v70 = vsel %vm68, %v26, 0
  %v73 = vsel %vm68, %v27, 0
  %v76 = vsel %vm68, %v28, 0
  %78 = vmatprep.subr.bf16.mxu0 0
  %79 = vmatpush1.bf16.msra.mxu0 0
  %80 = vmatprep.subr.bf16.mxu0 0
  %81 = vmatpush1.bf16.msra.mxu0 0
  %82 = vmatprep.subr.bf16.mxu0 0
  %83 = vmatpush1.bf16.msra.mxu0 0
  %84 = vmatprep.subr.bf16.mxu0 0
  %85 = vmatpush1.bf16.msra.mxu0 0
  %86 = vmatprep.subr.bf16.mxu0 0
  %87 = vmatpush1.bf16.msra.mxu0 %v63
  %88 = vmatprep.subr.bf16.mxu0 0
  %89 = vmatpush1.bf16.msra.mxu0 %v62
  %90 = vmatprep.subr.bf16.mxu0 0
  %91 = vmatpush1.bf16.msra.mxu0 %v61
  %92 = vmatprep.subr.bf16.mxu0 0
  %93 = vmatpush1.bf16.msra.mxu0 %v60
  %94 = vmatprep.subr.bf16.mxu0 0
  %95 = vmatpush2.bf16.msra.mxu0 0
  %96 = vmatprep.subr.bf16.mxu0 0
  %97 = vmatpush2.bf16.msra.mxu0 0
  %98 = vmatprep.subr.bf16.mxu0 0
  %99 = vmatpush2.bf16.msra.mxu0 0
  %100 = vmatprep.subr.bf16.mxu0 0
  %101 = vmatpush2.bf16.msra.mxu0 0
  %102 = vmatprep.subr.bf16.mxu0 0
  %103 = vmatpush2.bf16.msra.mxu0 0
  %104 = vmatprep.subr.bf16.mxu0 0
  %105 = vmatpush2.bf16.msra.mxu0 0
  %106 = vmatprep.subr.bf16.mxu0 0
  %107 = vmatpush2.bf16.msra.mxu0 0
  %108 = vmatprep.subr.bf16.mxu0 0
  %109 = vmatpush2.bf16.msra.mxu0 0
  %110 = vmatprep.mubr.bf16.mxu0 0
  %111 = vmatmul.mubr.bf16.gmra.mxu0 %v70
  %v112 = vpop.f32.mrf.mxu0
  %v113 = vadd.f32 %v42, %v112
  %v114 = vpop.f32.mrf.mxu0
  %v115 = vpop.f32.mrf.mxu0
  %v116 = vadd.f32 %v42, %v115
  %v117 = vpop.f32.mrf.mxu0
  %118 = vmatprep.mubr.bf16.mxu0 0
  %119 = vmatmul.mubr.bf16.gmra.mxu0 %v73
  %v120 = vpop.f32.mrf.mxu0
  %v121 = vadd.f32 %v42, %v120
  %v122 = vpop.f32.mrf.mxu0
  %v123 = vpop.f32.mrf.mxu0
  %v124 = vadd.f32 %v42, %v123
  %v125 = vpop.f32.mrf.mxu0
  %126 = vmatprep.mubr.bf16.mxu0 0
  %127 = vmatmul.mubr.bf16.gmra.mxu0 %v76
  %v128 = vpop.f32.mrf.mxu0
  %v129 = vadd.f32 %v42, %v128
  %v130 = vpop.f32.mrf.mxu0
  %v131 = vpop.f32.mrf.mxu0
  %v132 = vpop.f32.mrf.mxu0
  %133 = vdwg.mxu0
  %v134 = vmax.f32 %v113, 0.0
  %v135 = vmax.f32 %v116, 0.0
  %v136 = vmax.f32 %v121, 0.0
  %v137 = vmax.f32 %v124, 0.0
  %v138 = vmax.f32 %v129, 0.0
  %v139 = vpack.c.bf16 %v135, %v134
  %v140 = vpack.c.bf16 %v137, %v136
  %v141 = vpack.c.bf16 %v138, %v138
  %v142 = vld [vmem:[%s3] sm:$0xf]
  %v143 = vld [vmem:[%s3 + $0x4] sm:$0xf]
  %v144 = vld [vmem:[%s3 + $0x8] sm:$0xf]
  %v145 = vld [vmem:[%s3 + $0xc] sm:$0xf]
  %v146 = vld [vmem:[%s3 + $0x10] sm:$0xf]
  %v147 = vld [vmem:[%s3 + $0x14] sm:$0xf]
  %v148 = vld [vmem:[%s3 + $0x18] sm:$0xf]
  %v149 = vld [vmem:[%s3 + $0x1c] sm:$0xf]
  %v150 = vld [vmem:[%s3 + $0x20] sm:$0xf]
  %v151 = vld [vmem:[%s3 + $0x24] sm:$0xf]
  %v152 = vld [vmem:[%s3 + $0x28] sm:$0xf]
  %v153 = vld [vmem:[%s3 + $0x2c] sm:$0xf]
  %v154 = vld [vmem:[%s3 + $0x30] sm:$0xf]
  %v155 = vld [vmem:[%s3 + $0x34] sm:$0xf]
  %v156 = vld [vmem:[%s3 + $0x38] sm:$0xf]
  %v157 = vld [vmem:[%s3 + $0x3c] sm:$0xf]
  %v158 = vld [vmem:[%s4] sm:$0x1]
  %v160 = vlaneseq
  %v161 = vshrl.u32 %v160, 7
  %v162 = vsub.s32 0, %v161
  %v163 = vrot.slane %v158, %v162
  %v181 = vunpack.c.l.b16 %v142
  %v182 = vunpack.c.l.b16 %v143
  %v183 = vunpack.c.l.b16 %v144
  %v184 = vunpack.c.l.b16 %v145
  %v185 = vunpack.c.l.b16 %v146
  %v186 = vunpack.c.l.b16 %v147
  %v187 = vunpack.c.l.b16 %v148
  %v188 = vunpack.c.l.b16 %v149
  %v189 = vunpack.c.l.b16 %v150
  %v190 = vunpack.c.l.b16 %v151
  %v191 = vunpack.c.l.b16 %v152
  %v192 = vunpack.c.l.b16 %v153
  %v193 = vunpack.c.l.b16 %v154
  %v194 = vunpack.c.l.b16 %v155
  %v195 = vunpack.c.l.b16 %v156
  %v196 = vunpack.c.l.b16 %v157
  %v197 = vpack.c.b16 %v182, %v181
  %v198 = vpack.c.b16 %v184, %v183
  %v199 = vpack.c.b16 %v186, %v185
  %v200 = vpack.c.b16 %v188, %v187
  %v201 = vpack.c.b16 %v190, %v189
  %v202 = vpack.c.b16 %v192, %v191
  %v203 = vpack.c.b16 %v194, %v193
  %v204 = vpack.c.b16 %v196, %v195
  %213 = vmatprep.subr.bf16.mxu0 0
  %214 = vmatpush1.bf16.msra.mxu0 %v204
  %215 = vmatprep.subr.bf16.mxu0 0
  %216 = vmatpush1.bf16.msra.mxu0 %v203
  %217 = vmatprep.subr.bf16.mxu0 0
  %218 = vmatpush1.bf16.msra.mxu0 %v202
  %219 = vmatprep.subr.bf16.mxu0 0
  %220 = vmatpush1.bf16.msra.mxu0 %v201
  %221 = vmatprep.subr.bf16.mxu0 0
  %222 = vmatpush1.bf16.msra.mxu0 %v200
  %223 = vmatprep.subr.bf16.mxu0 0
  %224 = vmatpush1.bf16.msra.mxu0 %v199
  %225 = vmatprep.subr.bf16.mxu0 0
  %226 = vmatpush1.bf16.msra.mxu0 %v198
  %227 = vmatprep.subr.bf16.mxu0 0
  %228 = vmatpush1.bf16.msra.mxu0 %v197
  %229 = vmatprep.subr.bf16.mxu0 0
  %230 = vmatpush2.bf16.msra.mxu0 0
  %231 = vmatprep.subr.bf16.mxu0 0
  %232 = vmatpush2.bf16.msra.mxu0 0
  %233 = vmatprep.subr.bf16.mxu0 0
  %234 = vmatpush2.bf16.msra.mxu0 0
  %235 = vmatprep.subr.bf16.mxu0 0
  %236 = vmatpush2.bf16.msra.mxu0 0
  %237 = vmatprep.subr.bf16.mxu0 0
  %238 = vmatpush2.bf16.msra.mxu0 0
  %239 = vmatprep.subr.bf16.mxu0 0
  %240 = vmatpush2.bf16.msra.mxu0 0
  %241 = vmatprep.subr.bf16.mxu0 0
  %242 = vmatpush2.bf16.msra.mxu0 0
  %243 = vmatprep.subr.bf16.mxu0 0
  %244 = vmatpush2.bf16.msra.mxu0 0
  %245 = vmatprep.mubr.bf16.mxu0 0
  %246 = vmatmul.mubr.bf16.gmra.mxu0 %v139
  %v247 = vpop.f32.mrf.mxu0
  %v248 = vadd.f32 %v163, %v247
  %v249 = vpop.f32.mrf.mxu0
  %v250 = vpop.f32.mrf.mxu0
  %v251 = vadd.f32 %v163, %v250
  %v252 = vpop.f32.mrf.mxu0
  %253 = vmatprep.mubr.bf16.mxu0 0
  %254 = vmatmul.mubr.bf16.gmra.mxu0 %v140
  %v255 = vpop.f32.mrf.mxu0
  %v256 = vadd.f32 %v163, %v255
  %v257 = vpop.f32.mrf.mxu0
  %v258 = vpop.f32.mrf.mxu0
  %v259 = vadd.f32 %v163, %v258
  %v260 = vpop.f32.mrf.mxu0
  %261 = vmatprep.mubr.bf16.mxu0 0
  %262 = vmatmul.mubr.bf16.gmra.mxu0 %v141
  %v263 = vpop.f32.mrf.mxu0
  %v264 = vadd.f32 %v163, %v263
  %v265 = vpop.f32.mrf.mxu0
  %v266 = vpop.f32.mrf.mxu0
  %v267 = vpop.f32.mrf.mxu0
  %268 = vdwg.mxu0
  %vm269 = vcmask 80896
  %270 = vst.msk [vmem:[%s5] sm:$0xff] %vm269, %v248
  %271 = vst.msk [vmem:[%s5 + $0x8] sm:$0xff] %vm269, %v251
  %272 = vst.msk [vmem:[%s5 + $0x10] sm:$0xff] %vm269, %v256
  %273 = vst.msk [vmem:[%s5 + $0x18] sm:$0xff] %vm269, %v259
  %274 = vst.msk [vmem:[%s5 + $0x20] sm:$0xff] %vm269, %v264
  // Predicated region
  $region22: #{tpu_custom_call.1} parent=0 // pred_check
    _
  $region23: #{tpu_custom_call.1} parent=0 // pred_check_branch
    %276 = sbr.rel (0) target = $region25
  $region24: #{tpu_custom_call.1} parent=0 // pred_region
    _
  $region25: #{tpu_custom_call.1} parent=0 // pred_fallthru
    _
  // Predicated region
  $region26: #{tpu_custom_call.1} parent=0 // pred_check
    _
  $region27: #{tpu_custom_call.1} parent=0 // pred_check_branch
    %278 = sbr.rel (0) target = $region29
  $region28: #{tpu_custom_call.1} parent=0 // pred_region
    _
  $region29: #{tpu_custom_call.1} parent=0 // pred_fallthru
    _

</llo_original>
